<compile_context>
chip_gen: v7x
topology: tpu7x:2x2x1
jax: 0.10.0
libtpu: 0.0.40
codegen_flags: <defaults>
</compile_context>

<pallas_src>
import functools

import jax
import jax.numpy as jnp
from jax.experimental import pallas as pl
from jax.experimental.pallas import tpu as pltpu


def _round_up(x, m):
    return (x + m - 1) // m * m


def _conv2d_same_gemm_kernel(x_ref, w_ref, b_ref, o_ref, *, compute_dtype):
    # x_ref : (1, tile_oh, Wo_p, D)        D = K*K*Cin   (im2col patches)
    # w_ref : (D, Cout_p)                  grid-constant
    # b_ref : (1, Cout_p)                  grid-constant
    # o_ref : (1, tile_oh, Wo_p, Cout_p)   lane-dense output tile
    tile_oh, wo_p, d = x_ref.shape[1], x_ref.shape[2], x_ref.shape[3]
    cout_p = o_ref.shape[3]

    lhs = x_ref[...].reshape(tile_oh * wo_p, d)      # layout-trivial collapse
    if compute_dtype is not None and lhs.dtype != compute_dtype:
        lhs = lhs.astype(compute_dtype)              # e.g. bf16 MXU feeding

    # One MXU matmul per grid step; all K*K taps live in the contraction.
    acc = jnp.dot(lhs, w_ref[...], preferred_element_type=jnp.float32)
    acc = acc + b_ref[...].astype(jnp.float32)
    o_ref[...] = acc.reshape(1, tile_oh, wo_p, cout_p).astype(o_ref.dtype)


def conv2d_same(x_nchw, weight_oihw, bias, *, stride=1, tile_oh=None,
                mxu_dtype=None):
    """Conv2d_SAME.forward: zero-pad H/W by k//2, then conv with `stride`.

    x_nchw      : (N, Cin, H, W)
    weight_oihw : (Cout, Cin, K, K)   (PyTorch layout)
    bias        : (Cout,)
    mxu_dtype   : optional compute dtype for the matmul (e.g. jnp.bfloat16 on
                  v6e/v7x MXU-bound layers); accumulation stays f32.
    returns     : (N, Cout, Ho, Wo)
    """
    n, cin, h, w = x_nchw.shape
    cout, cin_w, k, k2 = weight_oihw.shape
    assert cin == cin_w
    assert k == k2, "Conv2d_SAME derives padding from a single (square) kernel_size"
    # TODO(synk): the custom_weight branch (depthwise groups=in_ch, bias=False)
    # of the PyTorch module is not implemented here.
    pad = max(k // 2, 0)

    dtype = x_nchw.dtype
    isz = jnp.dtype(dtype).itemsize
    cdtype = None if mxu_dtype is None else jnp.dtype(mxu_dtype)
    csz = isz if cdtype is None else jnp.dtype(cdtype).itemsize

    hp = h + 2 * pad
    wp = w + 2 * pad
    ho = (hp - k) // stride + 1
    wo = (wp - k) // stride + 1

    cout_p = _round_up(cout, 128)       # lane-dense output channels
    wo_p = _round_up(wo, 8)             # sublane-aligned output width
    d = k * k * cin                     # contraction depth (all taps folded)
    d_phys = _round_up(d, 128)          # physical lane footprint of the LHS

    # --- generation-aware VMEM budget / row-tile size ------------------------
    try:
        cap = int(pltpu.get_tpu_info().vmem_capacity_bytes)   # 64 MiB v7x, 128 MiB v5e/v6e
    except Exception:
        cap = 64 << 20
    vmem_limit = int(min(max(cap - (16 << 20), 24 << 20), 100 << 20))

    w_bytes = _round_up(d, 8) * cout_p * csz          # weight block (single-buffered)
    b_bytes = 8 * cout_p * isz                        # bias block
    per_row = (2 * wo_p * d_phys * isz                # input block, double-buffered
               + 2 * wo_p * cout_p * isz              # output block, double-buffered
               + wo_p * d_phys * csz                  # in-kernel LHS copy / cast
               + wo_p * cout_p * 4)                   # f32 accumulator value
    if tile_oh is None:
        budget = max(vmem_limit * 6 // 10 - (w_bytes + b_bytes), per_row)
        tile_oh = budget // per_row
    tile_oh = int(max(1, min(tile_oh, ho)))
    if n == 1 and ho > 1:                              # keep >=2 parallel steps (v7x 2 TCs)
        tile_oh = min(tile_oh, -(-ho // 2))
    n_ht = -(-ho // tile_oh)
    ho_p = n_ht * tile_oh

    # --- layout prep (plain JAX glue): NHWC, zero-pad, im2col ---------------
    # TODO(synk): for an NHWC end-to-end pipeline these transpose/pad passes
    # (and the output transpose) could be dropped entirely.
    h_need = (ho_p - 1) * stride + k
    w_need = (wo_p - 1) * stride + k
    x_nhwc = jnp.transpose(x_nchw, (0, 2, 3, 1))
    x_pad = jnp.pad(x_nhwc, ((0, 0),
                             (pad, max(h_need - h - pad, 0)),
                             (pad, max(w_need - w - pad, 0)),
                             (0, 0)))

    pieces = []
    for kh in range(k):
        for kw in range(k):
            pieces.append(jax.lax.slice(
                x_pad,
                (0, kh, kw, 0),
                (n, kh + (ho_p - 1) * stride + 1, kw + (wo_p - 1) * stride + 1, cin),
                (1, stride, stride, 1)))
    x_col = jnp.concatenate(pieces, axis=-1)          # (N, Ho_p, Wo_p, K*K*Cin)

    w_mat = jnp.transpose(weight_oihw, (2, 3, 1, 0)).reshape(d, cout)
    w_mat = jnp.pad(w_mat, ((0, 0), (0, cout_p - cout)))
    if cdtype is not None:
        w_mat = w_mat.astype(cdtype)
    w_isz = jnp.dtype(w_mat.dtype).itemsize
    b_row = jnp.pad(bias, (0, cout_p - cout)).reshape(1, cout_p)

    kernel = functools.partial(_conv2d_same_gemm_kernel, compute_dtype=cdtype)

    flops = 2 * n * ho_p * wo_p * cout_p * d
    bytes_accessed = (n * ho_p * wo_p * d_phys * isz          # lane-padded input read
                      + w_mat.size * w_isz + b_row.size * 4
                      + n * ho_p * wo_p * cout_p * isz)       # output write

    # TODO(synk): very large Cin*K*K or Cout layers would additionally want a
    # contraction / Cout grid axis; not needed for the module's typical shapes.

    def build_call(single_buffer_consts):
        const_kw = dict(pipeline_mode=pl.Buffered(1)) if single_buffer_consts else {}
        return pl.pallas_call(
            kernel,
            out_shape=jax.ShapeDtypeStruct((n, ho_p, wo_p, cout_p), dtype),
            grid_spec=pltpu.PrefetchScalarGridSpec(
                num_scalar_prefetch=0,
                grid=(n, n_ht),
                in_specs=[
                    pl.BlockSpec((1, tile_oh, wo_p, d), lambda i, t: (i, t, 0, 0)),
                    pl.BlockSpec((d, cout_p), lambda i, t: (0, 0), **const_kw),
                    pl.BlockSpec((1, cout_p), lambda i, t: (0, 0), **const_kw),
                ],
                out_specs=pl.BlockSpec((1, tile_oh, wo_p, cout_p),
                                       lambda i, t: (i, t, 0, 0)),
            ),
            compiler_params=pltpu.CompilerParams(
                dimension_semantics=("parallel", "parallel"),
                vmem_limit_bytes=int(vmem_limit),
            ),
            cost_estimate=pl.CostEstimate(flops=int(flops), transcendentals=0,
                                          bytes_accessed=int(bytes_accessed)),
        )

    try:
        out_nhwc = build_call(True)(x_col, w_mat, b_row)
    except Exception:
        # Older JAX without BlockSpec.pipeline_mode / Buffered(1) support.
        out_nhwc = build_call(False)(x_col, w_mat, b_row)

    out = out_nhwc[:, :ho, :wo, :cout]
    return jnp.transpose(out, (0, 3, 1, 2))           # back to NCHW


if __name__ == "__main__":
    def run_case(n, cin, h, w, cout, k, stride, tile_oh=None, mxu_dtype=None,
                 tol=5e-4):
        kx, kw_, kb = jax.random.split(jax.random.PRNGKey(0), 3)
        x = jax.random.normal(kx, (n, cin, h, w), dtype=jnp.float32)
        fan_in = cin * k * k
        bound = 1.0 / (fan_in ** 0.5)
        weight = jax.random.uniform(kw_, (cout, cin, k, k), jnp.float32, -bound, bound)
        bias = jax.random.uniform(kb, (cout,), jnp.float32, -bound, bound)

        out = conv2d_same(x, weight, bias, stride=stride, tile_oh=tile_oh,
                          mxu_dtype=mxu_dtype)
        out = jax.block_until_ready(out)

        pad = k // 2
        x_padded = jnp.pad(x, ((0, 0), (0, 0), (pad, pad), (pad, pad)))
        ref = jax.lax.conv_general_dilated(
            x_padded, weight, window_strides=(stride, stride), padding="VALID",
            dimension_numbers=("NCHW", "OIHW", "NCHW"),
        ) + bias.reshape(1, cout, 1, 1)
        assert out.shape == ref.shape, (out.shape, ref.shape)
        err = float(jnp.max(jnp.abs(out - ref)))
        assert err < tol, (err, tol)

    # Module-consistent small shapes: N=2, Cin=4 -> Cout=8, 16x16, k=3, stride=1.
    # tile_oh=8 forces two row tiles per image (exercises the row-tile grid).
    run_case(n=2, cin=4, h=16, w=16, cout=8, k=3, stride=1, tile_oh=8)
    # Odd spatial size + larger kernel, auto tile size.
    run_case(n=1, cin=3, h=13, w=13, cout=5, k=5, stride=1)
    # stride=2 path (stride folded wrapper-side into the im2col layout).
    run_case(n=2, cin=4, h=16, w=16, cout=8, k=3, stride=2)
    # Optional bf16 MXU feeding (v6e/v7x); f32 accumulation, looser tolerance.
    run_case(n=2, cin=4, h=16, w=16, cout=8, k=3, stride=1,
             mxu_dtype=jnp.bfloat16, tol=5e-2)

    print("KERNEL_OK")
</pallas_src>

<mosaic_0001>
module attributes {stable_mosaic.version = 11 : i64} {
  func.func @_conv2d_same_gemm_kernel(%arg0: i32, %arg1: i32, %arg2: memref<1x8x16x36xf32, #tpu.memory_space<vmem>>, %arg3: memref<36x128xf32, #tpu.memory_space<vmem>>, %arg4: memref<1x128xf32, #tpu.memory_space<vmem>>, %arg5: memref<1x8x16x128xf32, #tpu.memory_space<vmem>>) attributes {dimension_semantics = [#tpu.dimension_semantics<parallel>, #tpu.dimension_semantics<parallel>], iteration_bounds = array<i64: 2, 2>, scalar_prefetch = 0 : i64, scratch_operands = 0 : i64, tpu.core_type = #tpu.core_type<tc>, window_params = [{transform_indices = @transform_0, window_bounds = array<i64: 1, 8, 16, 36>}, {pipeline_mode = #tpu.pipeline_mode<synchronous>, transform_indices = @transform_1, window_bounds = array<i64: 36, 128>}, {pipeline_mode = #tpu.pipeline_mode<synchronous>, transform_indices = @transform_2, window_bounds = array<i64: 1, 128>}, {transform_indices = @transform_3, window_bounds = array<i64: 1, 8, 16, 128>}]} {
    %c0 = arith.constant 0 : index
    %c0_0 = arith.constant 0 : index
    %c0_1 = arith.constant 0 : index
    %c0_2 = arith.constant 0 : index
    %0 = vector.load %arg2[%c0, %c0_0, %c0_1, %c0_2] : memref<1x8x16x36xf32, #tpu.memory_space<vmem>>, vector<1x8x16x36xf32>
    %1 = vector.shape_cast %0 : vector<1x8x16x36xf32> to vector<128x36xf32>
    %c0_3 = arith.constant 0 : index
    %c0_4 = arith.constant 0 : index
    %2 = vector.load %arg3[%c0_3, %c0_4] : memref<36x128xf32, #tpu.memory_space<vmem>>, vector<36x128xf32>
    %cst = arith.constant dense<0.000000e+00> : vector<128x128xf32>
    %3 = tpu.matmul %1, %2, %cst {dimension_numbers = #tpu.dot_dimension_numbers<[1], [0], [0], [1], [0, 0, 1, 1], [], []>} : vector<128x36xf32>, vector<36x128xf32>, vector<128x128xf32> -> vector<128x128xf32>
    %c0_5 = arith.constant 0 : index
    %c0_6 = arith.constant 0 : index
    %4 = vector.load %arg4[%c0_5, %c0_6] : memref<1x128xf32, #tpu.memory_space<vmem>>, vector<1x128xf32>
    %5 = vector.broadcast %4 : vector<1x128xf32> to vector<128x128xf32>
    %6 = arith.addf %3, %5 : vector<128x128xf32>
    %7 = vector.shape_cast %6 : vector<128x128xf32> to vector<1x8x16x128xf32>
    %c0_7 = arith.constant 0 : index
    %c0_8 = arith.constant 0 : index
    %c0_9 = arith.constant 0 : index
    %c0_10 = arith.constant 0 : index
    %8 = vector.load %arg5[%c0_7, %c0_8, %c0_9, %c0_10] : memref<1x8x16x128xf32, #tpu.memory_space<vmem>>, vector<1x8x16x128xf32>
    tpu.vector_store %arg5[%c0_7, %c0_8, %c0_9, %c0_10], %7 {strides = array<i32>} : memref<1x8x16x128xf32, #tpu.memory_space<vmem>>, vector<1x8x16x128xf32>,
    return
  }
  func.func @transform_0(%arg0: i32, %arg1: i32) -> (i32, i32, i32, i32) {
    %c0_i32 = arith.constant 0 : i32
    %c0_i32_0 = arith.constant 0 : i32
    %c0_i32_1 = arith.constant 0 : i32
    return %arg0, %arg1, %c0_i32, %c0_i32_0 : i32, i32, i32, i32
  }
  func.func @transform_1(%arg0: i32, %arg1: i32) -> (i32, i32) {
    %c0_i32 = arith.constant 0 : i32
    %c0_i32_0 = arith.constant 0 : i32
    %c0_i32_1 = arith.constant 0 : i32
    return %c0_i32, %c0_i32_0 : i32, i32
  }
  func.func @transform_2(%arg0: i32, %arg1: i32) -> (i32, i32) {
    %c0_i32 = arith.constant 0 : i32
    %c0_i32_0 = arith.constant 0 : i32
    %c0_i32_1 = arith.constant 0 : i32
    return %c0_i32, %c0_i32_0 : i32, i32
  }
  func.func @transform_3(%arg0: i32, %arg1: i32) -> (i32, i32, i32, i32) {
    %c0_i32 = arith.constant 0 : i32
    %c0_i32_0 = arith.constant 0 : i32
    %c0_i32_1 = arith.constant 0 : i32
    return %arg0, %arg1, %c0_i32, %c0_i32_0 : i32, i32, i32, i32
  }
}

module attributes {stable_mosaic.version = 11 : i64} {
  func.func @_conv2d_same_gemm_kernel(%arg0: i32, %arg1: i32, %arg2: memref<1x8x16x36xf32, #tpu.memory_space<vmem>>, %arg3: memref<36x128xf32, #tpu.memory_space<vmem>>, %arg4: memref<1x128xf32, #tpu.memory_space<vmem>>, %arg5: memref<1x8x16x128xf32, #tpu.memory_space<vmem>>) attributes {dimension_semantics = [#tpu.dimension_semantics<parallel>, #tpu.dimension_semantics<parallel>], iteration_bounds = array<i64: 2, 2>, scalar_prefetch = 0 : i64, scratch_operands = 0 : i64, tpu.core_type = #tpu.core_type<tc>, window_params = [{transform_indices = @transform_0, window_bounds = array<i64: 1, 8, 16, 36>}, {pipeline_mode = #tpu.pipeline_mode<synchronous>, transform_indices = @transform_1, window_bounds = array<i64: 36, 128>}, {pipeline_mode = #tpu.pipeline_mode<synchronous>, transform_indices = @transform_2, window_bounds = array<i64: 1, 128>}, {transform_indices = @transform_3, window_bounds = array<i64: 1, 8, 16, 128>}]} {
    %c0 = arith.constant 0 : index
    %c0_0 = arith.constant 0 : index
    %c0_1 = arith.constant 0 : index
    %c0_2 = arith.constant 0 : index
    %0 = vector.load %arg2[%c0, %c0_0, %c0_1, %c0_2] : memref<1x8x16x36xf32, #tpu.memory_space<vmem>>, vector<1x8x16x36xf32>
    %1 = vector.shape_cast %0 : vector<1x8x16x36xf32> to vector<128x36xf32>
    %c0_3 = arith.constant 0 : index
    %c0_4 = arith.constant 0 : index
    %2 = vector.load %arg3[%c0_3, %c0_4] : memref<36x128xf32, #tpu.memory_space<vmem>>, vector<36x128xf32>
    %cst = arith.constant dense<0.000000e+00> : vector<128x128xf32>
    %3 = tpu.matmul %1, %2, %cst {dimension_numbers = #tpu.dot_dimension_numbers<[1], [0], [0], [1], [0, 0, 1, 1], [], []>} : vector<128x36xf32>, vector<36x128xf32>, vector<128x128xf32> -> vector<128x128xf32>
    %c0_5 = arith.constant 0 : index
    %c0_6 = arith.constant 0 : index
    %4 = vector.load %arg4[%c0_5, %c0_6] : memref<1x128xf32, #tpu.memory_space<vmem>>, vector<1x128xf32>
    %5 = vector.broadcast %4 : vector<1x128xf32> to vector<128x128xf32>
    %6 = arith.addf %3, %5 : vector<128x128xf32>
    %7 = vector.shape_cast %6 : vector<128x128xf32> to vector<1x8x16x128xf32>
    %c0_7 = arith.constant 0 : index
    %c0_8 = arith.constant 0 : index
    %c0_9 = arith.constant 0 : index
    %c0_10 = arith.constant 0 : index
    %8 = vector.load %arg5[%c0_7, %c0_8, %c0_9, %c0_10] : memref<1x8x16x128xf32, #tpu.memory_space<vmem>>, vector<1x8x16x128xf32>
    tpu.vector_store %arg5[%c0_7, %c0_8, %c0_9, %c0_10], %7 {strides = array<i32>} : memref<1x8x16x128xf32, #tpu.memory_space<vmem>>, vector<1x8x16x128xf32>,
    return
  }
  func.func @transform_0(%arg0: i32, %arg1: i32) -> (i32, i32, i32, i32) {
    %c0_i32 = arith.constant 0 : i32
    %c0_i32_0 = arith.constant 0 : i32
    %c0_i32_1 = arith.constant 0 : i32
    return %arg0, %arg1, %c0_i32, %c0_i32_0 : i32, i32, i32, i32
  }
  func.func @transform_1(%arg0: i32, %arg1: i32) -> (i32, i32) {
    %c0_i32 = arith.constant 0 : i32
    %c0_i32_0 = arith.constant 0 : i32
    %c0_i32_1 = arith.constant 0 : i32
    return %c0_i32, %c0_i32_0 : i32, i32
  }
  func.func @transform_2(%arg0: i32, %arg1: i32) -> (i32, i32) {
    %c0_i32 = arith.constant 0 : i32
    %c0_i32_0 = arith.constant 0 : i32
    %c0_i32_1 = arith.constant 0 : i32
    return %c0_i32, %c0_i32_0 : i32, i32
  }
  func.func @transform_3(%arg0: i32, %arg1: i32) -> (i32, i32, i32, i32) {
    %c0_i32 = arith.constant 0 : i32
    %c0_i32_0 = arith.constant 0 : i32
    %c0_i32_1 = arith.constant 0 : i32
    return %arg0, %arg1, %c0_i32, %c0_i32_0 : i32, i32, i32, i32
  }
}

</mosaic_0001>

<llo_original>
// kernel: tpu_custom_call.1
$region0: #{tpu_custom_call.1}
  #allocation0 [shape = 'u32[]', space=smem, size = 0x4, offset = 0x4, fixed_abs, tag = 'smem constant byte address 0x4 - core index']
  #allocation1 [shape = 'u32[144,128]{1,0:T(1,128)}', space=vmem, size = 0x12000, scoped, tag = 'internal scratch']
  %s0 = inlined_call_operand.hbm [shape: f32[2,16,16,36], index: 0, kind: input, shape index: {}]
  %s1 = inlined_call_operand.hbm [shape: f32[36,128], index: 1, kind: input, shape index: {}]
  %s2 = inlined_call_operand.vmem [shape: f32[1,128], index: 2, kind: input, shape index: {}]
  %s3 = inlined_call_operand.hbm [shape: f32[2,16,16,128], index: 3, kind: output, shape index: {}]
  %s4 = sld [smem:[#allocation0]]
  $region53: #{tpu_custom_call.1} parent=0
    _
  %s6 = ssub.s32 1, %s4
  %s7 = scalar_select 0, %s6, %s4
  $region1: #{tpu_custom_call.1} parent=0
    #allocation2 [shape = 'u8[131072]{0}', space=vmem, size = 0x20000, scoped, tag = 'input window, operand 0']
    #allocation3 [shape = 's32[2]{0}', space=sflag, size = 0x8, scoped, tag = 'scoped memory for tpu_custom_call.1']
    #allocation4 [shape = 's32[2]{0}', space=sflag, size = 0x8, scoped, tag = 'scoped memory for tpu_custom_call.1']
    #allocation5 [shape = 'u8[20480]{0}', space=vmem, size = 0x5000, scoped, tag = 'input window, operand 1, single buffered']
    #allocation6 [shape = 's32[1]{0}', space=sflag, size = 0x4, scoped, tag = 'scoped memory for tpu_custom_call.1']
    #allocation7 [shape = 'u8[131072]{0}', space=vmem, size = 0x20000, scoped, tag = 'output window, operand 0']
    %8 = vsyncpa [#allocation3], 0
    %s9 = scalar_lea.sflag [#allocation3], 1
    %10 = vsyncpa %s9, 0
    %11 = vsyncpa [#allocation6], 0
    %12 = vsyncpa [#allocation4], 0
    %s13 = scalar_lea.sflag [#allocation4], 1
    %14 = vsyncpa %s13, 0
    loop: start=0, step=1, limit=6
    $region2: #{tpu_custom_call.1} parent=1 // loop_pre_header
      _
    $region3: #{tpu_custom_call.1} parent=1 // loop_header
      %s16 = sphi 0, %s20
      %p17 = scmp.ge.s32.totalorder %s16, 6
      %s23 = sphi 0, %s35
      %s24 = sphi 0, %s31
      %s25 = sphi 0, %s23
      %s26 = sphi 0, %s24
      %s27 = sphi 0, %s25
      %s28 = sphi 0, %s26
      %s40 = sphi 0, %s42
      %s43 = sphi 0, %s40
      %s44 = sphi 0, %s43
      %s60 = sphi 0, %s44
      %s64 = sphi 0, %s64
      %s66 = sphi 0, %s64
      %s67 = sphi 0, %s66
      %s81 = sphi 0, %s67
      %s85 = sphi 0, %s85
      %s87 = sphi 0, %s85
      %s88 = sphi 0, %s87
      %s102 = sphi 0, %s88
      %s110 = sphi 0, %s112
      %s113 = sphi 0, %s110
      %s114 = sphi 0, %s113
      %s130 = sphi 0, %s114
    $region4: #{tpu_custom_call.1} parent=1 // loop_header_branch
      %19 = sbr.rel (%p17) target = $region8
    $region5: #{tpu_custom_call.1} parent=1 // loop_body
      %s21 = ssub.s32 %s16, 1
      %s22 = ssub.s32 %s16, 2
      %s29 = sadd.s32 1, %s24
      %p30 = scmp.ge.s32.totalorder %s29, 2
      %s31 = scalar_select %p30, 0, %s29
      %s32 = sadd.s32 1, %s23
      %s33 = scalar_select %p30, %s32, %s23
      %p34 = scmp.ge.s32.totalorder %s33, 2
      %s35 = scalar_select %p34, 0, %s33
      %s36 = ssub.s32 %s23, %s35
      %s37 = ssub.s32 %s24, %s31
      %s38 = sor.u32 %s36, %s37
      %p39 = scmp.eq.s32.totalorder %s38, 0
      %s41 = sadd.s32 %s40, 1
      %s42 = scalar_select %p39, %s40, %s41
      %p45 = pneg %p39
      %p46 = scmp.eq.s32.totalorder %s16, 3
      %p47 = por %p45, %p46
      %p48 = scmp.ne.s32.totalorder %s40, %s43
      %p49 = scmp.eq.s32.totalorder %s16, 0
      %p50 = por %p48, %p49
      %p51 = scmp.ne.s32.totalorder %s40, %s43
      %p52 = scmp.eq.s32.totalorder %s21, 3
      %p53 = por %p51, %p52
      %p54 = scmp.ne.s32.totalorder %s43, %s44
      %p55 = scmp.eq.s32.totalorder %s21, 0
      %p56 = por %p54, %p55
      %p57 = scmp.ne.s32.totalorder %s43, %s44
      %p58 = scmp.eq.s32.totalorder %s22, 3
      %p59 = por %p57, %p58
      %p61 = scmp.ne.s32.totalorder %s44, %s60
      %p62 = scmp.eq.s32.totalorder %s22, 0
      %p63 = por %p61, %p62
      %s65 = sadd.s32 %s64, 1
      %p68 = scmp.eq.s32.totalorder %s16, 3
      %p69 = scmp.ne.s32.totalorder %s64, %s66
      %p70 = scmp.eq.s32.totalorder %s16, 0
      %p71 = por %p69, %p70
      %p72 = scmp.ne.s32.totalorder %s64, %s66
      %p73 = scmp.eq.s32.totalorder %s21, 3
      %p74 = por %p72, %p73
      %p75 = scmp.ne.s32.totalorder %s66, %s67
      %p76 = scmp.eq.s32.totalorder %s21, 0
      %p77 = por %p75, %p76
      %p78 = scmp.ne.s32.totalorder %s66, %s67
      %p79 = scmp.eq.s32.totalorder %s22, 3
      %p80 = por %p78, %p79
      %p82 = scmp.ne.s32.totalorder %s67, %s81
      %p83 = scmp.eq.s32.totalorder %s22, 0
      %p84 = por %p82, %p83
      %s86 = sadd.s32 %s85, 1
      %p89 = scmp.eq.s32.totalorder %s16, 3
      %p90 = scmp.ne.s32.totalorder %s85, %s87
      %p91 = scmp.eq.s32.totalorder %s16, 0
      %p92 = por %p90, %p91
      %p93 = scmp.ne.s32.totalorder %s85, %s87
      %p94 = scmp.eq.s32.totalorder %s21, 3
      %p95 = por %p93, %p94
      %p96 = scmp.ne.s32.totalorder %s87, %s88
      %p97 = scmp.eq.s32.totalorder %s21, 0
      %p98 = por %p96, %p97
      %p99 = scmp.ne.s32.totalorder %s87, %s88
      %p100 = scmp.eq.s32.totalorder %s22, 3
      %p101 = por %p99, %p100
      %p103 = scmp.ne.s32.totalorder %s88, %s102
      %p104 = scmp.eq.s32.totalorder %s22, 0
      %p105 = por %p103, %p104
      %s106 = ssub.s32 %s23, %s35
      %s107 = ssub.s32 %s24, %s31
      %s108 = sor.u32 %s106, %s107
      %p109 = scmp.eq.s32.totalorder %s108, 0
      %s111 = sadd.s32 %s110, 1
      %s112 = scalar_select %p109, %s110, %s111
      %p115 = pneg %p109
      %p116 = scmp.eq.s32.totalorder %s16, 3
      %p117 = por %p115, %p116
      %p118 = scmp.ne.s32.totalorder %s110, %s113
      %p119 = scmp.eq.s32.totalorder %s16, 0
      %p120 = por %p118, %p119
      %p121 = scmp.ne.s32.totalorder %s110, %s113
      %p122 = scmp.eq.s32.totalorder %s21, 3
      %p123 = por %p121, %p122
      %p124 = scmp.ne.s32.totalorder %s113, %s114
      %p125 = scmp.eq.s32.totalorder %s21, 0
      %p126 = por %p124, %p125
      %p127 = scmp.ne.s32.totalorder %s113, %s114
      %p128 = scmp.eq.s32.totalorder %s22, 3
      %p129 = por %p127, %p128
      %p131 = scmp.ne.s32.totalorder %s114, %s130
      %p132 = scmp.eq.s32.totalorder %s22, 0
      %p133 = por %p131, %p132
      %p134 = scmp.le.s32.totalorder 1, %s16
      %p135 = scmp.lt.s32.totalorder %s16, 5
      %p136 = pnand %p134, %p135
      %p137 = pneg %p136
      // Predicated region
      $region9: #{tpu_custom_call.1} parent=5 // pred_check
        _
      $region10: #{tpu_custom_call.1} parent=5 // pred_check_branch
        %139 = sbr.rel (%p136) target = $region12
      $region11: #{tpu_custom_call.1} parent=5 // pred_region
        %s140 = ssub.s32 %s16, 1
        // Predicated region
        $region13: #{tpu_custom_call.1} parent=11 // pred_check
          %p141 = pneg %p77
        $region14: #{tpu_custom_call.1} parent=11 // pred_check_branch
          %143 = sbr.rel (%p141) target = $region16
        $region15: #{tpu_custom_call.1} parent=11 // pred_region
          %s145 = ssub.s32 640, 640
          %146 = vsyncadd [#allocation6], %s145
          %s147 = sshll.u32 [#allocation5], 4
          %s148 = int_to_ptr.vmem [resolvable:$true] %s147
          %153 = dma.hbm_to_vmem [thread:$0]  %s1, 640, %s148, [#allocation6], 128, 128, 8
        $region16: #{tpu_custom_call.1} parent=11 // pred_fallthru
          _
        // Predicated region
        $region17: #{tpu_custom_call.1} parent=11 // pred_check
          %p154 = pneg %p98
        $region18: #{tpu_custom_call.1} parent=11 // pred_check_branch
          %156 = sbr.rel (%p154) target = $region20
        $region19: #{tpu_custom_call.1} parent=11 // pred_region
          _
        $region20: #{tpu_custom_call.1} parent=11 // pred_fallthru
          _
      $region12: #{tpu_custom_call.1} parent=5 // pred_fallthru
        _
      %p157 = scmp.lt.s32.totalorder %s16, 4
      // Predicated region
      $region21: #{tpu_custom_call.1} parent=5 // pred_check
        %p158 = pneg %p157
      $region22: #{tpu_custom_call.1} parent=5 // pred_check_branch
        %160 = sbr.rel (%p158) target = $region24
      $region23: #{tpu_custom_call.1} parent=5 // pred_region
        // Predicated region
        $region25: #{tpu_custom_call.1} parent=23 // pred_check
          %p161 = pneg %p50
        $region26: #{tpu_custom_call.1} parent=23 // pred_check_branch
          %163 = sbr.rel (%p161) target = $region28
        $region27: #{tpu_custom_call.1} parent=23 // pred_region
          %s164 = sand.u32 %s40, 1
          %s165 = scalar_lea.sflag [#allocation3], %s164
          %s166 = sand.u32 %s40, 1
          %s167 = smul.addr %s166, 128
          %s168 = scalar_lea.vmem [#allocation2], %s167
          %s169 = smul.u32 8, %s24
          %s171 = ssub.s32 2048, 2048
          %172 = vsyncadd %s165, %s171
          %s173 = smul.addr %s169, 2
          %s174 = smul.addr %s23, 32
          %s175 = sadd.s32 %s173, %s174
          %s176 = smul.addr %s175, 128
          %s177 = scalar_lea.hbm %s0, %s176
          %s178 = sshll.u32 %s168, 4
          %s179 = int_to_ptr.vmem [resolvable:$true] %s178
          %184 = dma.hbm_to_vmem [thread:$0]  %s177, 2048, %s179, %s165, 128, 128, 8
        $region28: #{tpu_custom_call.1} parent=23 // pred_fallthru
          _
      $region24: #{tpu_custom_call.1} parent=5 // pred_fallthru
        _
      %p185 = scmp.le.s32.totalorder 1, %s16
      %p186 = scmp.lt.s32.totalorder %s16, 5
      %p187 = pnand %p185, %p186
      %p188 = pneg %p187
      // Predicated region
      $region29: #{tpu_custom_call.1} parent=5 // pred_check
        _
      $region30: #{tpu_custom_call.1} parent=5 // pred_check_branch
        %190 = sbr.rel (%p187) target = $region32
      $region31: #{tpu_custom_call.1} parent=5 // pred_region
        %s191 = ssub.s32 %s16, 1
        %s192 = sand.u32 %s43, 1
        %s193 = scalar_lea.sflag [#allocation3], %s192
        %s194 = sand.u32 %s43, 1
        %s195 = smul.addr %s194, 128
        %s196 = scalar_lea.vmem [#allocation2], %s195
        // Predicated region
        $region33: #{tpu_custom_call.1} parent=31 // pred_check
          %p197 = pneg %p56
        $region34: #{tpu_custom_call.1} parent=31 // pred_check_branch
          %199 = sbr.rel (%p197) target = $region36
        $region35: #{tpu_custom_call.1} parent=31 // pred_region
          %200 = dma.done %s193, 2048
        $region36: #{tpu_custom_call.1} parent=31 // pred_fallthru
          _
        // Predicated region
        $region37: #{tpu_custom_call.1} parent=31 // pred_check
          %p201 = pneg %p77
        $region38: #{tpu_custom_call.1} parent=31 // pred_check_branch
          %203 = sbr.rel (%p201) target = $region40
        $region39: #{tpu_custom_call.1} parent=31 // pred_region
          %204 = dma.done [#allocation6], 640
        $region40: #{tpu_custom_call.1} parent=31 // pred_fallthru
          _
        %s205 = sand.u32 %s43, 1
        %s206 = scalar_lea.sflag [#allocation3], %s205
        %s207 = sand.u32 %s43, 1
        %s208 = smul.addr %s207, 128
        %s209 = scalar_lea.vmem [#allocation2], %s208
        %p210 = pneg %p56
        %p211 = pneg %p53
        %p212 = pneg %p77
        %p213 = pneg %p74
        %p214 = pneg %p98
        %p215 = pneg %p95
        %p216 = pneg %p126
        %p217 = pneg %p123
        %s218 = sand.u32 %s113, 1
        %s219 = scalar_lea.sflag [#allocation4], %s218
        %s220 = sand.u32 %s113, 1
        %s221 = smul.addr %s220, 128
        %s222 = scalar_lea.vmem [#allocation7], %s221
        %s223 = smul.u32 8, %s26
        %s224 = smul.u32 8, %s26
        %v225 = vld [vmem:[%s196] sm:$0xff]
        %v226 = vld [vmem:[%s196 + $0x8] sm:$0xff]
        %v227 = vld [vmem:[%s196 + $0x10] sm:$0xff]
        %v228 = vld [vmem:[%s196 + $0x18] sm:$0xff]
        %v229 = vld [vmem:[%s196 + $0x20] sm:$0xff]
        %v230 = vld [vmem:[%s196 + $0x28] sm:$0xff]
        %v231 = vld [vmem:[%s196 + $0x30] sm:$0xff]
        %v232 = vld [vmem:[%s196 + $0x38] sm:$0xff]
        %v233 = vld [vmem:[%s196 + $0x40] sm:$0xff]
        %v234 = vld [vmem:[%s196 + $0x48] sm:$0xff]
        %v235 = vld [vmem:[%s196 + $0x50] sm:$0xff]
        %v236 = vld [vmem:[%s196 + $0x58] sm:$0xff]
        %v237 = vld [vmem:[%s196 + $0x60] sm:$0xff]
        %v238 = vld [vmem:[%s196 + $0x68] sm:$0xff]
        %v239 = vld [vmem:[%s196 + $0x70] sm:$0xff]
        %v240 = vld [vmem:[%s196 + $0x78] sm:$0xff]
        %v241 = vld [vmem:[#allocation5] sm:$0xff]
        %v242 = vld [vmem:[#allocation5 + $0x8] sm:$0xff]
        %v243 = vld [vmem:[#allocation5 + $0x10] sm:$0xff]
        %v244 = vld [vmem:[#allocation5 + $0x18] sm:$0xff]
        %v245 = vld [vmem:[#allocation5 + $0x20] sm:$0xf]
        %v246 = vld [vmem:[%s2] sm:$0x1]
        %v248 = vlaneseq
        %v249 = vshrl.u32 %v248, 7
        %v250 = vsub.s32 0, %v249
        %v251 = vrot.slane %v246, %v250
        %vm253 = vcmask 293888
        %v255 = vsel %vm253, %v225, 0
        %v258 = vsel %vm253, %v226, 0
        %v261 = vsel %vm253, %v227, 0
        %v264 = vsel %vm253, %v228, 0
        %v267 = vsel %vm253, %v229, 0
        %v270 = vsel %vm253, %v230, 0
        %v273 = vsel %vm253, %v231, 0
        %v276 = vsel %vm253, %v232, 0
        %v279 = vsel %vm253, %v233, 0
        %v282 = vsel %vm253, %v234, 0
        %v285 = vsel %vm253, %v235, 0
        %v288 = vsel %vm253, %v236, 0
        %v291 = vsel %vm253, %v237, 0
        %v294 = vsel %vm253, %v238, 0
        %v297 = vsel %vm253, %v239, 0
        %v300 = vsel %vm253, %v240, 0
        %vm302 = vcmask 1043456
        %v304 = vsel %vm302, %v245, 0
        %306 = vmatprep.subr.mxu0 0.0
        %307 = vmatpush1.msra.mxu0 %v241
        %308 = vmatprep.subr.mxu0 0.0
        %309 = vmatpush1.msra.mxu0 %v242
        %310 = vmatprep.subr.mxu0 0.0
        %311 = vmatpush1.msra.mxu0 %v243
        %312 = vmatprep.subr.mxu0 0.0
        %313 = vmatpush1.msra.mxu0 %v244
        %314 = vmatprep.subr.mxu0 0.0
        %315 = vmatpush1.msra.mxu0 %v304
        %316 = vmatprep.subr.mxu0 0.0
        %317 = vmatpush1.msra.mxu0 0.0
        %318 = vmatprep.subr.mxu0 0.0
        %319 = vmatpush1.msra.mxu0 0.0
        %320 = vmatprep.subr.mxu0 0.0
        %321 = vmatpush1.msra.mxu0 0.0
        %322 = vmatprep.subr.mxu0 0.0
        %323 = vmatpush1.msra.mxu0 0.0
        %324 = vmatprep.subr.mxu0 0.0
        %325 = vmatpush1.msra.mxu0 0.0
        %326 = vmatprep.subr.mxu0 0.0
        %327 = vmatpush1.msra.mxu0 0.0
        %328 = vmatprep.subr.mxu0 0.0
        %329 = vmatpush1.msra.mxu0 0.0
        %330 = vmatprep.subr.mxu0 0.0
        %331 = vmatpush1.msra.mxu0 0.0
        %332 = vmatprep.subr.mxu0 0.0
        %333 = vmatpush1.msra.mxu0 0.0
        %334 = vmatprep.subr.mxu0 0.0
        %335 = vmatpush1.msra.mxu0 0.0
        %336 = vmatprep.subr.mxu0 0.0
        %337 = vmatpush1.msra.mxu0 0.0
        %338 = vmatprep.subr.mxu0 0.0
        %339 = vmatpush1.msra.mxu0 0.0
        %340 = vmatprep.subr.mxu0 0.0
        %341 = vmatpush1.msra.mxu0 0.0
        %342 = vmatprep.subr.mxu0 0.0
        %343 = vmatpush1.msra.mxu0 0.0
        %344 = vmatprep.subr.mxu0 0.0
        %345 = vmatpush1.msra.mxu0 0.0
        %346 = vmatprep.subr.mxu0 0.0
        %347 = vmatpush1.msra.mxu0 0.0
        %348 = vmatprep.subr.mxu0 0.0
        %349 = vmatpush1.msra.mxu0 0.0
        %350 = vmatprep.subr.mxu0 0.0
        %351 = vmatpush1.msra.mxu0 0.0
        %352 = vmatprep.subr.mxu0 0.0
        %353 = vmatpush1.msra.mxu0 0.0
        %354 = vmatprep.subr.mxu0 0.0
        %355 = vmatpush1.msra.mxu0 0.0
        %356 = vmatprep.subr.mxu0 0.0
        %357 = vmatpush1.msra.mxu0 0.0
        %358 = vmatprep.subr.mxu0 0.0
        %359 = vmatpush1.msra.mxu0 0.0
        %360 = vmatprep.subr.mxu0 0.0
        %361 = vmatpush1.msra.mxu0 0.0
        %362 = vmatprep.subr.mxu0 0.0
        %363 = vmatpush1.msra.mxu0 0.0
        %364 = vmatprep.subr.mxu0 0.0
        %365 = vmatpush1.msra.mxu0 0.0
        %366 = vmatprep.subr.mxu0 0.0
        %367 = vmatpush1.msra.mxu0 0.0
        %368 = vmatprep.subr.mxu0 0.0
        %369 = vmatpush1.msra.mxu0 0.0
        %370 = vmatprep.mubr.f32.mxu0 0.0
        %371 = vmatmul.mubr.f32.gmra.mrb[0].mxu0 %v255
        %v372 = vpop.f32.mrb[0].mxu0
        %v373 = vadd.f32 %v251, %v372
        %v374 = vpop.f32.mrb[0].mxu0
        %375 = vmatprep.mubr.f32.mxu0 0.0
        %376 = vmatmul.mubr.f32.gmra.mrb[0].mxu0 %v258
        %v377 = vpop.f32.mrb[0].mxu0
        %v378 = vadd.f32 %v251, %v377
        %v379 = vpop.f32.mrb[0].mxu0
        %380 = vmatprep.mubr.f32.mxu0 0.0
        %381 = vmatmul.mubr.f32.gmra.mrb[0].mxu0 %v261
        %v382 = vpop.f32.mrb[0].mxu0
        %v383 = vadd.f32 %v251, %v382
        %v384 = vpop.f32.mrb[0].mxu0
        %385 = vmatprep.mubr.f32.mxu0 0.0
        %386 = vmatmul.mubr.f32.gmra.mrb[0].mxu0 %v264
        %v387 = vpop.f32.mrb[0].mxu0
        %v388 = vadd.f32 %v251, %v387
        %v389 = vpop.f32.mrb[0].mxu0
        %390 = vmatprep.mubr.f32.mxu0 0.0
        %391 = vmatmul.mubr.f32.gmra.mrb[0].mxu0 %v267
        %v392 = vpop.f32.mrb[0].mxu0
        %v393 = vadd.f32 %v251, %v392
        %v394 = vpop.f32.mrb[0].mxu0
        %395 = vmatprep.mubr.f32.mxu0 0.0
        %396 = vmatmul.mubr.f32.gmra.mrb[0].mxu0 %v270
        %v397 = vpop.f32.mrb[0].mxu0
        %v398 = vadd.f32 %v251, %v397
        %v399 = vpop.f32.mrb[0].mxu0
        %400 = vmatprep.mubr.f32.mxu0 0.0
        %401 = vmatmul.mubr.f32.gmra.mrb[0].mxu0 %v273
        %v402 = vpop.f32.mrb[0].mxu0
        %v403 = vadd.f32 %v251, %v402
        %v404 = vpop.f32.mrb[0].mxu0
        %405 = vmatprep.mubr.f32.mxu0 0.0
        %406 = vmatmul.mubr.f32.gmra.mrb[0].mxu0 %v276
        %v407 = vpop.f32.mrb[0].mxu0
        %v408 = vadd.f32 %v251, %v407
        %v409 = vpop.f32.mrb[0].mxu0
        %410 = vmatprep.mubr.f32.mxu0 0.0
        %411 = vmatmul.mubr.f32.gmra.mrb[0].mxu0 %v279
        %v412 = vpop.f32.mrb[0].mxu0
        %v413 = vadd.f32 %v251, %v412
        %v414 = vpop.f32.mrb[0].mxu0
        %415 = vmatprep.mubr.f32.mxu0 0.0
        %416 = vmatmul.mubr.f32.gmra.mrb[0].mxu0 %v282
        %v417 = vpop.f32.mrb[0].mxu0
        %v418 = vadd.f32 %v251, %v417
        %v419 = vpop.f32.mrb[0].mxu0
        %420 = vmatprep.mubr.f32.mxu0 0.0
        %421 = vmatmul.mubr.f32.gmra.mrb[0].mxu0 %v285
        %v422 = vpop.f32.mrb[0].mxu0
        %v423 = vadd.f32 %v251, %v422
        %v424 = vpop.f32.mrb[0].mxu0
        %425 = vmatprep.mubr.f32.mxu0 0.0
        %426 = vmatmul.mubr.f32.gmra.mrb[0].mxu0 %v288
        %v427 = vpop.f32.mrb[0].mxu0
        %v428 = vadd.f32 %v251, %v427
        %v429 = vpop.f32.mrb[0].mxu0
        %430 = vmatprep.mubr.f32.mxu0 0.0
        %431 = vmatmul.mubr.f32.gmra.mrb[0].mxu0 %v291
        %v432 = vpop.f32.mrb[0].mxu0
        %v433 = vadd.f32 %v251, %v432
        %v434 = vpop.f32.mrb[0].mxu0
        %435 = vmatprep.mubr.f32.mxu0 0.0
        %436 = vmatmul.mubr.f32.gmra.mrb[0].mxu0 %v294
        %v437 = vpop.f32.mrb[0].mxu0
        %v438 = vadd.f32 %v251, %v437
        %v439 = vpop.f32.mrb[0].mxu0
        %440 = vmatprep.mubr.f32.mxu0 0.0
        %441 = vmatmul.mubr.f32.gmra.mrb[0].mxu0 %v297
        %v442 = vpop.f32.mrb[0].mxu0
        %v443 = vadd.f32 %v251, %v442
        %v444 = vpop.f32.mrb[0].mxu0
        %445 = vmatprep.mubr.f32.mxu0 0.0
        %446 = vmatmul.mubr.f32.gmra.mrb[0].mxu0 %v300
        %v447 = vpop.f32.mrb[0].mxu0
        %v448 = vadd.f32 %v251, %v447
        %v449 = vpop.f32.mrb[0].mxu0
        %450 = vdwg.mxu0
        %451 = vst [vmem:[%s222] sm:$0xff] %v373
        %452 = vst [vmem:[%s222 + $0x8] sm:$0xff] %v378
        %453 = vst [vmem:[%s222 + $0x10] sm:$0xff] %v383
        %454 = vst [vmem:[%s222 + $0x18] sm:$0xff] %v388
        %455 = vst [vmem:[%s222 + $0x20] sm:$0xff] %v393
        %456 = vst [vmem:[%s222 + $0x28] sm:$0xff] %v398
        %457 = vst [vmem:[%s222 + $0x30] sm:$0xff] %v403
        %458 = vst [vmem:[%s222 + $0x38] sm:$0xff] %v408
        %459 = vst [vmem:[%s222 + $0x40] sm:$0xff] %v413
        %460 = vst [vmem:[%s222 + $0x48] sm:$0xff] %v418
        %461 = vst [vmem:[%s222 + $0x50] sm:$0xff] %v423
        %462 = vst [vmem:[%s222 + $0x58] sm:$0xff] %v428
        %463 = vst [vmem:[%s222 + $0x60] sm:$0xff] %v433
        %464 = vst [vmem:[%s222 + $0x68] sm:$0xff] %v438
        %465 = vst [vmem:[%s222 + $0x70] sm:$0xff] %v443
        %466 = vst [vmem:[%s222 + $0x78] sm:$0xff] %v448
        %s467 = sand.u32 %s113, 1
        %s468 = scalar_lea.sflag [#allocation4], %s467
        %s469 = sand.u32 %s113, 1
        %s470 = smul.addr %s469, 128
        %s471 = scalar_lea.vmem [#allocation7], %s470
        // Predicated region
        $region41: #{tpu_custom_call.1} parent=31 // pred_check
          %p472 = pneg %p123
        $region42: #{tpu_custom_call.1} parent=31 // pred_check_branch
          %474 = sbr.rel (%p472) target = $region44
        $region43: #{tpu_custom_call.1} parent=31 // pred_region
          %s475 = smul.u32 8, %s26
          %s477 = ssub.s32 2048, 2048
          %478 = vsyncadd %s468, %s477
          %s479 = smul.addr %s475, 2
          %s480 = smul.addr %s25, 32
          %s481 = sadd.s32 %s479, %s480
          %s482 = smul.addr %s481, 128
          %s483 = scalar_lea.hbm %s3, %s482
          %s484 = sshll.u32 %s471, 4
          %s485 = int_to_ptr.vmem [resolvable:$true] %s484
          %490 = dma.vmem_to_hbm [thread:$0]  %s485, 2048, %s483, %s468, 128, 128, 8
        $region44: #{tpu_custom_call.1} parent=31 // pred_fallthru
          _
      $region32: #{tpu_custom_call.1} parent=5 // pred_fallthru
        _
      %p491 = scmp.le.s32.totalorder 2, %s16
      // Predicated region
      $region45: #{tpu_custom_call.1} parent=5 // pred_check
        %p492 = pneg %p491
      $region46: #{tpu_custom_call.1} parent=5 // pred_check_branch
        %494 = sbr.rel (%p492) target = $region48
      $region47: #{tpu_custom_call.1} parent=5 // pred_region
        %s495 = ssub.s32 %s16, 2
        // Predicated region
        $region49: #{tpu_custom_call.1} parent=47 // pred_check
          %p496 = pneg %p129
        $region50: #{tpu_custom_call.1} parent=47 // pred_check_branch
          %498 = sbr.rel (%p496) target = $region52
        $region51: #{tpu_custom_call.1} parent=47 // pred_region
          %s499 = sand.u32 %s114, 1
          %s500 = scalar_lea.sflag [#allocation4], %s499
          %s501 = sand.u32 %s114, 1
          %s502 = smul.addr %s501, 128
          %s503 = scalar_lea.vmem [#allocation7], %s502
          %504 = dma.done %s500, 2048
        $region52: #{tpu_custom_call.1} parent=47 // pred_fallthru
          _
      $region48: #{tpu_custom_call.1} parent=5 // pred_fallthru
        _
    $region6: #{tpu_custom_call.1} parent=1 // loop_footer
      %s20 = sadd.s32 1, %s16
    $region7: #{tpu_custom_call.1} parent=1 // loop_footer_branch
      %15 = sbr.rel target = $region3
    $region8: #{tpu_custom_call.1} parent=1 // loop_exit
      _
    %505 = vsyncpa [#allocation3], 1
    %s506 = scalar_lea.sflag [#allocation3], 1
    %507 = vsyncpa %s506, 1
    %508 = vsyncpa [#allocation6], 1
    %509 = vsyncpa [#allocation4], 1
    %s510 = scalar_lea.sflag [#allocation4], 1
    %511 = vsyncpa %s510, 1

// kernel: tpu_custom_call.1
$region0: #{tpu_custom_call.1}
  #allocation0 [shape = 'u32[]', space=smem, size = 0x4, offset = 0x4, fixed_abs, tag = 'smem constant byte address 0x4 - core index']
  #allocation1 [shape = 'u32[144,128]{1,0:T(1,128)}', space=vmem, size = 0x12000, scoped, tag = 'internal scratch']
  %s0 = inlined_call_operand.hbm [shape: f32[2,16,16,36], index: 0, kind: input, shape index: {}]
  %s1 = inlined_call_operand.hbm [shape: f32[36,128], index: 1, kind: input, shape index: {}]
  %s2 = inlined_call_operand.vmem [shape: f32[1,128], index: 2, kind: input, shape index: {}]
  %s3 = inlined_call_operand.hbm [shape: f32[2,16,16,128], index: 3, kind: output, shape index: {}]
  %s4 = sld [smem:[#allocation0]]
  $region53: #{tpu_custom_call.1} parent=0
    _
  %s6 = ssub.s32 1, %s4
  %s7 = scalar_select 0, %s6, %s4
  $region1: #{tpu_custom_call.1} parent=0
    #allocation2 [shape = 'u8[131072]{0}', space=vmem, size = 0x20000, scoped, tag = 'input window, operand 0']
    #allocation3 [shape = 's32[2]{0}', space=sflag, size = 0x8, scoped, tag = 'scoped memory for tpu_custom_call.1']
    #allocation4 [shape = 's32[2]{0}', space=sflag, size = 0x8, scoped, tag = 'scoped memory for tpu_custom_call.1']
    #allocation5 [shape = 'u8[20480]{0}', space=vmem, size = 0x5000, scoped, tag = 'input window, operand 1, single buffered']
    #allocation6 [shape = 's32[1]{0}', space=sflag, size = 0x4, scoped, tag = 'scoped memory for tpu_custom_call.1']
    #allocation7 [shape = 'u8[131072]{0}', space=vmem, size = 0x20000, scoped, tag = 'output window, operand 0']
    %8 = vsyncpa [#allocation3], 0
    %s9 = scalar_lea.sflag [#allocation3], 1
    %10 = vsyncpa %s9, 0
    %11 = vsyncpa [#allocation6], 0
    %12 = vsyncpa [#allocation4], 0
    %s13 = scalar_lea.sflag [#allocation4], 1
    %14 = vsyncpa %s13, 0
    loop: start=0, step=1, limit=6
    $region2: #{tpu_custom_call.1} parent=1 // loop_pre_header
      _
    $region3: #{tpu_custom_call.1} parent=1 // loop_header
      %s16 = sphi 0, %s20
      %p17 = scmp.ge.s32.totalorder %s16, 6
      %s23 = sphi 0, %s35
      %s24 = sphi 0, %s31
      %s25 = sphi 0, %s23
      %s26 = sphi 0, %s24
      %s27 = sphi 0, %s25
      %s28 = sphi 0, %s26
      %s40 = sphi 0, %s42
      %s43 = sphi 0, %s40
      %s44 = sphi 0, %s43
      %s60 = sphi 0, %s44
      %s64 = sphi 0, %s64
      %s66 = sphi 0, %s64
      %s67 = sphi 0, %s66
      %s81 = sphi 0, %s67
      %s85 = sphi 0, %s85
      %s87 = sphi 0, %s85
      %s88 = sphi 0, %s87
      %s102 = sphi 0, %s88
      %s110 = sphi 0, %s112
      %s113 = sphi 0, %s110
      %s114 = sphi 0, %s113
      %s130 = sphi 0, %s114
    $region4: #{tpu_custom_call.1} parent=1 // loop_header_branch
      %19 = sbr.rel (%p17) target = $region8
    $region5: #{tpu_custom_call.1} parent=1 // loop_body
      %s21 = ssub.s32 %s16, 1
      %s22 = ssub.s32 %s16, 2
      %s29 = sadd.s32 1, %s24
      %p30 = scmp.ge.s32.totalorder %s29, 2
      %s31 = scalar_select %p30, 0, %s29
      %s32 = sadd.s32 1, %s23
      %s33 = scalar_select %p30, %s32, %s23
      %p34 = scmp.ge.s32.totalorder %s33, 2
      %s35 = scalar_select %p34, 0, %s33
      %s36 = ssub.s32 %s23, %s35
      %s37 = ssub.s32 %s24, %s31
      %s38 = sor.u32 %s36, %s37
      %p39 = scmp.eq.s32.totalorder %s38, 0
      %s41 = sadd.s32 %s40, 1
      %s42 = scalar_select %p39, %s40, %s41
      %p45 = pneg %p39
      %p46 = scmp.eq.s32.totalorder %s16, 3
      %p47 = por %p45, %p46
      %p48 = scmp.ne.s32.totalorder %s40, %s43
      %p49 = scmp.eq.s32.totalorder %s16, 0
      %p50 = por %p48, %p49
      %p51 = scmp.ne.s32.totalorder %s40, %s43
      %p52 = scmp.eq.s32.totalorder %s21, 3
      %p53 = por %p51, %p52
      %p54 = scmp.ne.s32.totalorder %s43, %s44
      %p55 = scmp.eq.s32.totalorder %s21, 0
      %p56 = por %p54, %p55
      %p57 = scmp.ne.s32.totalorder %s43, %s44
      %p58 = scmp.eq.s32.totalorder %s22, 3
      %p59 = por %p57, %p58
      %p61 = scmp.ne.s32.totalorder %s44, %s60
      %p62 = scmp.eq.s32.totalorder %s22, 0
      %p63 = por %p61, %p62
      %s65 = sadd.s32 %s64, 1
      %p68 = scmp.eq.s32.totalorder %s16, 3
      %p69 = scmp.ne.s32.totalorder %s64, %s66
      %p70 = scmp.eq.s32.totalorder %s16, 0
      %p71 = por %p69, %p70
      %p72 = scmp.ne.s32.totalorder %s64, %s66
      %p73 = scmp.eq.s32.totalorder %s21, 3
      %p74 = por %p72, %p73
      %p75 = scmp.ne.s32.totalorder %s66, %s67
      %p76 = scmp.eq.s32.totalorder %s21, 0
      %p77 = por %p75, %p76
      %p78 = scmp.ne.s32.totalorder %s66, %s67
      %p79 = scmp.eq.s32.totalorder %s22, 3
      %p80 = por %p78, %p79
      %p82 = scmp.ne.s32.totalorder %s67, %s81
      %p83 = scmp.eq.s32.totalorder %s22, 0
      %p84 = por %p82, %p83
      %s86 = sadd.s32 %s85, 1
      %p89 = scmp.eq.s32.totalorder %s16, 3
      %p90 = scmp.ne.s32.totalorder %s85, %s87
      %p91 = scmp.eq.s32.totalorder %s16, 0
      %p92 = por %p90, %p91
      %p93 = scmp.ne.s32.totalorder %s85, %s87
      %p94 = scmp.eq.s32.totalorder %s21, 3
      %p95 = por %p93, %p94
      %p96 = scmp.ne.s32.totalorder %s87, %s88
      %p97 = scmp.eq.s32.totalorder %s21, 0
      %p98 = por %p96, %p97
      %p99 = scmp.ne.s32.totalorder %s87, %s88
      %p100 = scmp.eq.s32.totalorder %s22, 3
      %p101 = por %p99, %p100
      %p103 = scmp.ne.s32.totalorder %s88, %s102
      %p104 = scmp.eq.s32.totalorder %s22, 0
      %p105 = por %p103, %p104
      %s106 = ssub.s32 %s23, %s35
      %s107 = ssub.s32 %s24, %s31
      %s108 = sor.u32 %s106, %s107
      %p109 = scmp.eq.s32.totalorder %s108, 0
      %s111 = sadd.s32 %s110, 1
      %s112 = scalar_select %p109, %s110, %s111
      %p115 = pneg %p109
      %p116 = scmp.eq.s32.totalorder %s16, 3
      %p117 = por %p115, %p116
      %p118 = scmp.ne.s32.totalorder %s110, %s113
      %p119 = scmp.eq.s32.totalorder %s16, 0
      %p120 = por %p118, %p119
      %p121 = scmp.ne.s32.totalorder %s110, %s113
      %p122 = scmp.eq.s32.totalorder %s21, 3
      %p123 = por %p121, %p122
      %p124 = scmp.ne.s32.totalorder %s113, %s114
      %p125 = scmp.eq.s32.totalorder %s21, 0
      %p126 = por %p124, %p125
      %p127 = scmp.ne.s32.totalorder %s113, %s114
      %p128 = scmp.eq.s32.totalorder %s22, 3
      %p129 = por %p127, %p128
      %p131 = scmp.ne.s32.totalorder %s114, %s130
      %p132 = scmp.eq.s32.totalorder %s22, 0
      %p133 = por %p131, %p132
      %p134 = scmp.le.s32.totalorder 1, %s16
      %p135 = scmp.lt.s32.totalorder %s16, 5
      %p136 = pnand %p134, %p135
      %p137 = pneg %p136
      // Predicated region
      $region9: #{tpu_custom_call.1} parent=5 // pred_check
        _
      $region10: #{tpu_custom_call.1} parent=5 // pred_check_branch
        %139 = sbr.rel (%p136) target = $region12
      $region11: #{tpu_custom_call.1} parent=5 // pred_region
        %s140 = ssub.s32 %s16, 1
        // Predicated region
        $region13: #{tpu_custom_call.1} parent=11 // pred_check
          %p141 = pneg %p77
        $region14: #{tpu_custom_call.1} parent=11 // pred_check_branch
          %143 = sbr.rel (%p141) target = $region16
        $region15: #{tpu_custom_call.1} parent=11 // pred_region
          %s145 = ssub.s32 640, 640
          %146 = vsyncadd [#allocation6], %s145
          %s147 = sshll.u32 [#allocation5], 4
          %s148 = int_to_ptr.vmem [resolvable:$true] %s147
          %153 = dma.hbm_to_vmem [thread:$0]  %s1, 640, %s148, [#allocation6], 128, 128, 8
        $region16: #{tpu_custom_call.1} parent=11 // pred_fallthru
          _
        // Predicated region
        $region17: #{tpu_custom_call.1} parent=11 // pred_check
          %p154 = pneg %p98
        $region18: #{tpu_custom_call.1} parent=11 // pred_check_branch
          %156 = sbr.rel (%p154) target = $region20
        $region19: #{tpu_custom_call.1} parent=11 // pred_region
          _
        $region20: #{tpu_custom_call.1} parent=11 // pred_fallthru
          _
      $region12: #{tpu_custom_call.1} parent=5 // pred_fallthru
        _
      %p157 = scmp.lt.s32.totalorder %s16, 4
      // Predicated region
      $region21: #{tpu_custom_call.1} parent=5 // pred_check
        %p158 = pneg %p157
      $region22: #{tpu_custom_call.1} parent=5 // pred_check_branch
        %160 = sbr.rel (%p158) target = $region24
      $region23: #{tpu_custom_call.1} parent=5 // pred_region
        // Predicated region
        $region25: #{tpu_custom_call.1} parent=23 // pred_check
          %p161 = pneg %p50
        $region26: #{tpu_custom_call.1} parent=23 // pred_check_branch
          %163 = sbr.rel (%p161) target = $region28
        $region27: #{tpu_custom_call.1} parent=23 // pred_region
          %s164 = sand.u32 %s40, 1
          %s165 = scalar_lea.sflag [#allocation3], %s164
          %s166 = sand.u32 %s40, 1
          %s167 = smul.addr %s166, 128
          %s168 = scalar_lea.vmem [#allocation2], %s167
          %s169 = smul.u32 8, %s24
          %s171 = ssub.s32 2048, 2048
          %172 = vsyncadd %s165, %s171
          %s173 = smul.addr %s169, 2
          %s174 = smul.addr %s23, 32
          %s175 = sadd.s32 %s173, %s174
          %s176 = smul.addr %s175, 128
          %s177 = scalar_lea.hbm %s0, %s176
          %s178 = sshll.u32 %s168, 4
          %s179 = int_to_ptr.vmem [resolvable:$true] %s178
          %184 = dma.hbm_to_vmem [thread:$0]  %s177, 2048, %s179, %s165, 128, 128, 8
        $region28: #{tpu_custom_call.1} parent=23 // pred_fallthru
          _
      $region24: #{tpu_custom_call.1} parent=5 // pred_fallthru
        _
      %p185 = scmp.le.s32.totalorder 1, %s16
      %p186 = scmp.lt.s32.totalorder %s16, 5
      %p187 = pnand %p185, %p186
      %p188 = pneg %p187
      // Predicated region
      $region29: #{tpu_custom_call.1} parent=5 // pred_check
        _
      $region30: #{tpu_custom_call.1} parent=5 // pred_check_branch
        %190 = sbr.rel (%p187) target = $region32
      $region31: #{tpu_custom_call.1} parent=5 // pred_region
        %s191 = ssub.s32 %s16, 1
        %s192 = sand.u32 %s43, 1
        %s193 = scalar_lea.sflag [#allocation3], %s192
        %s194 = sand.u32 %s43, 1
        %s195 = smul.addr %s194, 128
        %s196 = scalar_lea.vmem [#allocation2], %s195
        // Predicated region
        $region33: #{tpu_custom_call.1} parent=31 // pred_check
          %p197 = pneg %p56
        $region34: #{tpu_custom_call.1} parent=31 // pred_check_branch
          %199 = sbr.rel (%p197) target = $region36
        $region35: #{tpu_custom_call.1} parent=31 // pred_region
          %200 = dma.done %s193, 2048
        $region36: #{tpu_custom_call.1} parent=31 // pred_fallthru
          _
        // Predicated region
        $region37: #{tpu_custom_call.1} parent=31 // pred_check
          %p201 = pneg %p77
        $region38: #{tpu_custom_call.1} parent=31 // pred_check_branch
          %203 = sbr.rel (%p201) target = $region40
        $region39: #{tpu_custom_call.1} parent=31 // pred_region
          %204 = dma.done [#allocation6], 640
        $region40: #{tpu_custom_call.1} parent=31 // pred_fallthru
          _
        %s205 = sand.u32 %s43, 1
        %s206 = scalar_lea.sflag [#allocation3], %s205
        %s207 = sand.u32 %s43, 1
        %s208 = smul.addr %s207, 128
        %s209 = scalar_lea.vmem [#allocation2], %s208
        %p210 = pneg %p56
        %p211 = pneg %p53
        %p212 = pneg %p77
        %p213 = pneg %p74
        %p214 = pneg %p98
        %p215 = pneg %p95
        %p216 = pneg %p126
        %p217 = pneg %p123
        %s218 = sand.u32 %s113, 1
        %s219 = scalar_lea.sflag [#allocation4], %s218
        %s220 = sand.u32 %s113, 1
        %s221 = smul.addr %s220, 128
        %s222 = scalar_lea.vmem [#allocation7], %s221
        %s223 = smul.u32 8, %s26
        %s224 = smul.u32 8, %s26
        %v225 = vld [vmem:[%s196] sm:$0xff]
        %v226 = vld [vmem:[%s196 + $0x8] sm:$0xff]
        %v227 = vld [vmem:[%s196 + $0x10] sm:$0xff]
        %v228 = vld [vmem:[%s196 + $0x18] sm:$0xff]
        %v229 = vld [vmem:[%s196 + $0x20] sm:$0xff]
        %v230 = vld [vmem:[%s196 + $0x28] sm:$0xff]
        %v231 = vld [vmem:[%s196 + $0x30] sm:$0xff]
        %v232 = vld [vmem:[%s196 + $0x38] sm:$0xff]
        %v233 = vld [vmem:[%s196 + $0x40] sm:$0xff]
        %v234 = vld [vmem:[%s196 + $0x48] sm:$0xff]
        %v235 = vld [vmem:[%s196 + $0x50] sm:$0xff]
        %v236 = vld [vmem:[%s196 + $0x58] sm:$0xff]
        %v237 = vld [vmem:[%s196 + $0x60] sm:$0xff]
        %v238 = vld [vmem:[%s196 + $0x68] sm:$0xff]
        %v239 = vld [vmem:[%s196 + $0x70] sm:$0xff]
        %v240 = vld [vmem:[%s196 + $0x78] sm:$0xff]
        %v241 = vld [vmem:[#allocation5] sm:$0xff]
        %v242 = vld [vmem:[#allocation5 + $0x8] sm:$0xff]
        %v243 = vld [vmem:[#allocation5 + $0x10] sm:$0xff]
        %v244 = vld [vmem:[#allocation5 + $0x18] sm:$0xff]
        %v245 = vld [vmem:[#allocation5 + $0x20] sm:$0xf]
        %v246 = vld [vmem:[%s2] sm:$0x1]
        %v248 = vlaneseq
        %v249 = vshrl.u32 %v248, 7
        %v250 = vsub.s32 0, %v249
        %v251 = vrot.slane %v246, %v250
        %vm253 = vcmask 293888
        %v255 = vsel %vm253, %v225, 0
        %v258 = vsel %vm253, %v226, 0
        %v261 = vsel %vm253, %v227, 0
        %v264 = vsel %vm253, %v228, 0
        %v267 = vsel %vm253, %v229, 0
        %v270 = vsel %vm253, %v230, 0
        %v273 = vsel %vm253, %v231, 0
        %v276 = vsel %vm253, %v232, 0
        %v279 = vsel %vm253, %v233, 0
        %v282 = vsel %vm253, %v234, 0
        %v285 = vsel %vm253, %v235, 0
        %v288 = vsel %vm253, %v236, 0
        %v291 = vsel %vm253, %v237, 0
        %v294 = vsel %vm253, %v238, 0
        %v297 = vsel %vm253, %v239, 0
        %v300 = vsel %vm253, %v240, 0
        %vm302 = vcmask 1043456
        %v304 = vsel %vm302, %v245, 0
        %306 = vmatprep.subr.mxu0 0.0
        %307 = vmatpush1.msra.mxu0 %v241
        %308 = vmatprep.subr.mxu0 0.0
        %309 = vmatpush1.msra.mxu0 %v242
        %310 = vmatprep.subr.mxu0 0.0
        %311 = vmatpush1.msra.mxu0 %v243
        %312 = vmatprep.subr.mxu0 0.0
        %313 = vmatpush1.msra.mxu0 %v244
        %314 = vmatprep.subr.mxu0 0.0
        %315 = vmatpush1.msra.mxu0 %v304
        %316 = vmatprep.subr.mxu0 0.0
        %317 = vmatpush1.msra.mxu0 0.0
        %318 = vmatprep.subr.mxu0 0.0
        %319 = vmatpush1.msra.mxu0 0.0
        %320 = vmatprep.subr.mxu0 0.0
        %321 = vmatpush1.msra.mxu0 0.0
        %322 = vmatprep.subr.mxu0 0.0
        %323 = vmatpush1.msra.mxu0 0.0
        %324 = vmatprep.subr.mxu0 0.0
        %325 = vmatpush1.msra.mxu0 0.0
        %326 = vmatprep.subr.mxu0 0.0
        %327 = vmatpush1.msra.mxu0 0.0
        %328 = vmatprep.subr.mxu0 0.0
        %329 = vmatpush1.msra.mxu0 0.0
        %330 = vmatprep.subr.mxu0 0.0
        %331 = vmatpush1.msra.mxu0 0.0
        %332 = vmatprep.subr.mxu0 0.0
        %333 = vmatpush1.msra.mxu0 0.0
        %334 = vmatprep.subr.mxu0 0.0
        %335 = vmatpush1.msra.mxu0 0.0
        %336 = vmatprep.subr.mxu0 0.0
        %337 = vmatpush1.msra.mxu0 0.0
        %338 = vmatprep.subr.mxu0 0.0
        %339 = vmatpush1.msra.mxu0 0.0
        %340 = vmatprep.subr.mxu0 0.0
        %341 = vmatpush1.msra.mxu0 0.0
        %342 = vmatprep.subr.mxu0 0.0
        %343 = vmatpush1.msra.mxu0 0.0
        %344 = vmatprep.subr.mxu0 0.0
        %345 = vmatpush1.msra.mxu0 0.0
        %346 = vmatprep.subr.mxu0 0.0
        %347 = vmatpush1.msra.mxu0 0.0
        %348 = vmatprep.subr.mxu0 0.0
        %349 = vmatpush1.msra.mxu0 0.0
        %350 = vmatprep.subr.mxu0 0.0
        %351 = vmatpush1.msra.mxu0 0.0
        %352 = vmatprep.subr.mxu0 0.0
        %353 = vmatpush1.msra.mxu0 0.0
        %354 = vmatprep.subr.mxu0 0.0
        %355 = vmatpush1.msra.mxu0 0.0
        %356 = vmatprep.subr.mxu0 0.0
        %357 = vmatpush1.msra.mxu0 0.0
        %358 = vmatprep.subr.mxu0 0.0
        %359 = vmatpush1.msra.mxu0 0.0
        %360 = vmatprep.subr.mxu0 0.0
        %361 = vmatpush1.msra.mxu0 0.0
        %362 = vmatprep.subr.mxu0 0.0
        %363 = vmatpush1.msra.mxu0 0.0
        %364 = vmatprep.subr.mxu0 0.0
        %365 = vmatpush1.msra.mxu0 0.0
        %366 = vmatprep.subr.mxu0 0.0
        %367 = vmatpush1.msra.mxu0 0.0
        %368 = vmatprep.subr.mxu0 0.0
        %369 = vmatpush1.msra.mxu0 0.0
        %370 = vmatprep.mubr.f32.mxu0 0.0
        %371 = vmatmul.mubr.f32.gmra.mrb[0].mxu0 %v255
        %v372 = vpop.f32.mrb[0].mxu0
        %v373 = vadd.f32 %v251, %v372
        %v374 = vpop.f32.mrb[0].mxu0
        %375 = vmatprep.mubr.f32.mxu0 0.0
        %376 = vmatmul.mubr.f32.gmra.mrb[0].mxu0 %v258
        %v377 = vpop.f32.mrb[0].mxu0
        %v378 = vadd.f32 %v251, %v377
        %v379 = vpop.f32.mrb[0].mxu0
        %380 = vmatprep.mubr.f32.mxu0 0.0
        %381 = vmatmul.mubr.f32.gmra.mrb[0].mxu0 %v261
        %v382 = vpop.f32.mrb[0].mxu0
        %v383 = vadd.f32 %v251, %v382
        %v384 = vpop.f32.mrb[0].mxu0
        %385 = vmatprep.mubr.f32.mxu0 0.0
        %386 = vmatmul.mubr.f32.gmra.mrb[0].mxu0 %v264
        %v387 = vpop.f32.mrb[0].mxu0
        %v388 = vadd.f32 %v251, %v387
        %v389 = vpop.f32.mrb[0].mxu0
        %390 = vmatprep.mubr.f32.mxu0 0.0
        %391 = vmatmul.mubr.f32.gmra.mrb[0].mxu0 %v267
        %v392 = vpop.f32.mrb[0].mxu0
        %v393 = vadd.f32 %v251, %v392
        %v394 = vpop.f32.mrb[0].mxu0
        %395 = vmatprep.mubr.f32.mxu0 0.0
        %396 = vmatmul.mubr.f32.gmra.mrb[0].mxu0 %v270
        %v397 = vpop.f32.mrb[0].mxu0
        %v398 = vadd.f32 %v251, %v397
        %v399 = vpop.f32.mrb[0].mxu0
        %400 = vmatprep.mubr.f32.mxu0 0.0
        %401 = vmatmul.mubr.f32.gmra.mrb[0].mxu0 %v273
        %v402 = vpop.f32.mrb[0].mxu0
        %v403 = vadd.f32 %v251, %v402
        %v404 = vpop.f32.mrb[0].mxu0
        %405 = vmatprep.mubr.f32.mxu0 0.0
        %406 = vmatmul.mubr.f32.gmra.mrb[0].mxu0 %v276
        %v407 = vpop.f32.mrb[0].mxu0
        %v408 = vadd.f32 %v251, %v407
        %v409 = vpop.f32.mrb[0].mxu0
        %410 = vmatprep.mubr.f32.mxu0 0.0
        %411 = vmatmul.mubr.f32.gmra.mrb[0].mxu0 %v279
        %v412 = vpop.f32.mrb[0].mxu0
        %v413 = vadd.f32 %v251, %v412
        %v414 = vpop.f32.mrb[0].mxu0
        %415 = vmatprep.mubr.f32.mxu0 0.0
        %416 = vmatmul.mubr.f32.gmra.mrb[0].mxu0 %v282
        %v417 = vpop.f32.mrb[0].mxu0
        %v418 = vadd.f32 %v251, %v417
        %v419 = vpop.f32.mrb[0].mxu0
        %420 = vmatprep.mubr.f32.mxu0 0.0
        %421 = vmatmul.mubr.f32.gmra.mrb[0].mxu0 %v285
        %v422 = vpop.f32.mrb[0].mxu0
        %v423 = vadd.f32 %v251, %v422
        %v424 = vpop.f32.mrb[0].mxu0
        %425 = vmatprep.mubr.f32.mxu0 0.0
        %426 = vmatmul.mubr.f32.gmra.mrb[0].mxu0 %v288
        %v427 = vpop.f32.mrb[0].mxu0
        %v428 = vadd.f32 %v251, %v427
        %v429 = vpop.f32.mrb[0].mxu0
        %430 = vmatprep.mubr.f32.mxu0 0.0
        %431 = vmatmul.mubr.f32.gmra.mrb[0].mxu0 %v291
        %v432 = vpop.f32.mrb[0].mxu0
        %v433 = vadd.f32 %v251, %v432
        %v434 = vpop.f32.mrb[0].mxu0
        %435 = vmatprep.mubr.f32.mxu0 0.0
        %436 = vmatmul.mubr.f32.gmra.mrb[0].mxu0 %v294
        %v437 = vpop.f32.mrb[0].mxu0
        %v438 = vadd.f32 %v251, %v437
        %v439 = vpop.f32.mrb[0].mxu0
        %440 = vmatprep.mubr.f32.mxu0 0.0
        %441 = vmatmul.mubr.f32.gmra.mrb[0].mxu0 %v297
        %v442 = vpop.f32.mrb[0].mxu0
        %v443 = vadd.f32 %v251, %v442
        %v444 = vpop.f32.mrb[0].mxu0
        %445 = vmatprep.mubr.f32.mxu0 0.0
        %446 = vmatmul.mubr.f32.gmra.mrb[0].mxu0 %v300
        %v447 = vpop.f32.mrb[0].mxu0
        %v448 = vadd.f32 %v251, %v447
        %v449 = vpop.f32.mrb[0].mxu0
        %450 = vdwg.mxu0
        %451 = vst [vmem:[%s222] sm:$0xff] %v373
        %452 = vst [vmem:[%s222 + $0x8] sm:$0xff] %v378
        %453 = vst [vmem:[%s222 + $0x10] sm:$0xff] %v383
        %454 = vst [vmem:[%s222 + $0x18] sm:$0xff] %v388
        %455 = vst [vmem:[%s222 + $0x20] sm:$0xff] %v393
        %456 = vst [vmem:[%s222 + $0x28] sm:$0xff] %v398
        %457 = vst [vmem:[%s222 + $0x30] sm:$0xff] %v403
        %458 = vst [vmem:[%s222 + $0x38] sm:$0xff] %v408
        %459 = vst [vmem:[%s222 + $0x40] sm:$0xff] %v413
        %460 = vst [vmem:[%s222 + $0x48] sm:$0xff] %v418
        %461 = vst [vmem:[%s222 + $0x50] sm:$0xff] %v423
        %462 = vst [vmem:[%s222 + $0x58] sm:$0xff] %v428
        %463 = vst [vmem:[%s222 + $0x60] sm:$0xff] %v433
        %464 = vst [vmem:[%s222 + $0x68] sm:$0xff] %v438
        %465 = vst [vmem:[%s222 + $0x70] sm:$0xff] %v443
        %466 = vst [vmem:[%s222 + $0x78] sm:$0xff] %v448
        %s467 = sand.u32 %s113, 1
        %s468 = scalar_lea.sflag [#allocation4], %s467
        %s469 = sand.u32 %s113, 1
        %s470 = smul.addr %s469, 128
        %s471 = scalar_lea.vmem [#allocation7], %s470
        // Predicated region
        $region41: #{tpu_custom_call.1} parent=31 // pred_check
          %p472 = pneg %p123
        $region42: #{tpu_custom_call.1} parent=31 // pred_check_branch
          %474 = sbr.rel (%p472) target = $region44
        $region43: #{tpu_custom_call.1} parent=31 // pred_region
          %s475 = smul.u32 8, %s26
          %s477 = ssub.s32 2048, 2048
          %478 = vsyncadd %s468, %s477
          %s479 = smul.addr %s475, 2
          %s480 = smul.addr %s25, 32
          %s481 = sadd.s32 %s479, %s480
          %s482 = smul.addr %s481, 128
          %s483 = scalar_lea.hbm %s3, %s482
          %s484 = sshll.u32 %s471, 4
          %s485 = int_to_ptr.vmem [resolvable:$true] %s484
          %490 = dma.vmem_to_hbm [thread:$0]  %s485, 2048, %s483, %s468, 128, 128, 8
        $region44: #{tpu_custom_call.1} parent=31 // pred_fallthru
          _
      $region32: #{tpu_custom_call.1} parent=5 // pred_fallthru
        _
      %p491 = scmp.le.s32.totalorder 2, %s16
      // Predicated region
      $region45: #{tpu_custom_call.1} parent=5 // pred_check
        %p492 = pneg %p491
      $region46: #{tpu_custom_call.1} parent=5 // pred_check_branch
        %494 = sbr.rel (%p492) target = $region48
      $region47: #{tpu_custom_call.1} parent=5 // pred_region
        %s495 = ssub.s32 %s16, 2
        // Predicated region
        $region49: #{tpu_custom_call.1} parent=47 // pred_check
          %p496 = pneg %p129
        $region50: #{tpu_custom_call.1} parent=47 // pred_check_branch
          %498 = sbr.rel (%p496) target = $region52
        $region51: #{tpu_custom_call.1} parent=47 // pred_region
          %s499 = sand.u32 %s114, 1
          %s500 = scalar_lea.sflag [#allocation4], %s499
          %s501 = sand.u32 %s114, 1
          %s502 = smul.addr %s501, 128
          %s503 = scalar_lea.vmem [#allocation7], %s502
          %504 = dma.done %s500, 2048
        $region52: #{tpu_custom_call.1} parent=47 // pred_fallthru
          _
      $region48: #{tpu_custom_call.1} parent=5 // pred_fallthru
        _
    $region6: #{tpu_custom_call.1} parent=1 // loop_footer
      %s20 = sadd.s32 1, %s16
    $region7: #{tpu_custom_call.1} parent=1 // loop_footer_branch
      %15 = sbr.rel target = $region3
    $region8: #{tpu_custom_call.1} parent=1 // loop_exit
      _
    %505 = vsyncpa [#allocation3], 1
    %s506 = scalar_lea.sflag [#allocation3], 1
    %507 = vsyncpa %s506, 1
    %508 = vsyncpa [#allocation6], 1
    %509 = vsyncpa [#allocation4], 1
    %s510 = scalar_lea.sflag [#allocation4], 1
    %511 = vsyncpa %s510, 1

</llo_original>
